<compile_context>
chip_gen: v6e
topology: v6e:2x2x1
jax: 0.10.0
libtpu: 0.0.40
codegen_flags: <defaults>
</compile_context>

<pallas_src>
import jax
import jax.numpy as jnp
from jax.experimental import pallas as pl
from jax.experimental.pallas import tpu as pltpu


def _round_up(x, m):
    return (x + m - 1) // m * m


def _device_kind():
    try:
        return jax.devices()[0].device_kind.lower()
    except Exception:
        return ""


def _vmem_capacity_bytes(kind):
    try:
        cap = int(pltpu.get_tpu_info().vmem_capacity_bytes)
        if cap > 0:
            return cap
    except Exception:
        pass
    if "7x" in kind or "v7" in kind:
        return 64 * 1024 * 1024
    return 128 * 1024 * 1024


def _actor_kernel(x_ref, w1_ref, b1_ref, w2_ref, b2_ref, o_ref):
    """Fused Actor forward for one batch tile.

    x_ref:  (TM, IN)     f32  (cast to bf16 in-register for the MXU)
    w1_ref: (IN, H_P)    bf16     b1_ref: (1, H_P)  f32
    w2_ref: (H_P, OUT)   bf16     b2_ref: (1, OUT)  f32
    o_ref:  (TM, OUT)    f32
    """
    # hidden layer: bf16 MXU operands, f32 accumulation, f32 ReLU on the VPU
    x = x_ref[...].astype(w1_ref.dtype)
    h = jnp.dot(x, w1_ref[...], preferred_element_type=jnp.float32) + b1_ref[...]
    h = jnp.maximum(h, 0.0)

    # output layer (padded hidden columns are exactly zero -> no masking needed,
    # and the output feature dim is unpadded -> no iota/where mask needed)
    logits = jnp.dot(h.astype(w2_ref.dtype), w2_ref[...],
                     preferred_element_type=jnp.float32) + b2_ref[...]

    # softmax over dim=1; exact divide so rows sum to 1 to f32 precision
    m = jnp.max(logits, axis=1, keepdims=True)
    e = jnp.exp(logits - m)
    s = jnp.sum(e, axis=1, keepdims=True)
    o_ref[...] = (e / s).astype(o_ref.dtype)


def prepare_params(params):
    """One-time weight preparation (hoisted out of the steady-state forward).

    Only the hidden axis is padded to a lane-dense multiple of 128; the input
    and output feature axes stay unpadded (their blocks use the full dim).
    """
    w1, b1, w2, b2 = params              # w1:(in,H) b1:(H,) w2:(H,out) b2:(out,)
    in_size, hidden = w1.shape
    out_size = w2.shape[1]
    h_p = _round_up(hidden, 128)

    w1_p = jnp.zeros((in_size, h_p), jnp.bfloat16).at[:, :hidden].set(
        w1.astype(jnp.bfloat16))
    b1_p = jnp.zeros((1, h_p), jnp.float32).at[0, :hidden].set(b1)
    w2_p = jnp.zeros((h_p, out_size), jnp.bfloat16).at[:hidden, :].set(
        w2.astype(jnp.bfloat16))
    b2_p = b2.astype(jnp.float32).reshape(1, out_size)
    return (w1_p, b1_p, w2_p, b2_p)


def actor_forward(state, prepared_params):
    """Forward pass: batch-tiled 1-D grid, VMEM-resident weights."""
    w1_p, b1_p, w2_p, b2_p = prepared_params
    batch, in_size = state.shape
    h_p = w1_p.shape[1]
    out_size = w2_p.shape[1]

    kind = _device_kind()
    is_v5e = ("v5" in kind) and ("lite" in kind or "v5e" in kind)
    is_v7 = ("7x" in kind) or ("v7" in kind)
    vmem_cap = _vmem_capacity_bytes(kind)

    # ---- batch tiling (generation-aware) ---------------------------------
    tm_target = 128 if is_v5e else 512       # v6e/v7x MXU wants M >= 256
    if batch >= tm_target:
        tm = tm_target
    else:
        tm = _round_up(batch, 8)
    batch_p = _round_up(batch, tm)

    # v7x has 2 TensorCores/chip: make the "parallel" axis have >= 2 steps
    if is_v7 and (batch_p // tm) < 2 and batch_p >= 32:
        tm = _round_up((batch_p + 1) // 2, 8)
        batch_p = _round_up(batch, tm)

    # ---- VMEM budget: single-counted weights + double-buffered act tiles --
    weight_bytes = (in_size * h_p + h_p * out_size) * 2 + (h_p + out_size) * 4
    single_buffer_weights = weight_bytes > (8 << 20)   # only for very wide layers
    weight_bufs = 1 if single_buffer_weights else 2

    def footprint(t):
        act = 2 * (t * in_size * 4 + t * out_size * 4)        # x / out tiles, 2 bufs
        scratch = t * h_p * 6 + t * out_size * 4              # h (f32 + bf16), logits
        return weight_bufs * weight_bytes + act + scratch

    while tm > 16 and footprint(tm) > vmem_cap - (24 << 20):
        tm = max(16, _round_up(tm // 2, 8))
        batch_p = _round_up(batch, tm)

    grid = (batch_p // tm,)

    vmem_limit = int(min(vmem_cap - (8 << 20),
                         max(32 << 20, 2 * footprint(tm))))
    vmem_limit = int(min(max(vmem_limit, footprint(tm) + (4 << 20)),
                         vmem_cap - (8 << 20)))

    # ---- pad the batch only when required (rows sliced off afterwards) ----
    if batch_p != batch:
        x_in = jnp.zeros((batch_p, in_size), state.dtype).at[:batch].set(state)
    else:
        x_in = state

    w_kwargs = {}
    if single_buffer_weights:
        # constant-index weights never change block index; one buffer suffices
        w_kwargs["pipeline_mode"] = pl.Buffered(1)
    # TODO(synk): if weights still exceed the VMEM budget (huge hidden), add a
    # K-tiling grid axis over h_p marked "arbitrary" with an f32 accumulator.

    out_p = pl.pallas_call(
        _actor_kernel,
        out_shape=jax.ShapeDtypeStruct((batch_p, out_size), jnp.float32),
        grid=grid,
        in_specs=[
            pl.BlockSpec((tm, in_size), lambda i: (i, 0)),                # x: batch-tiled
            pl.BlockSpec((in_size, h_p), lambda i: (0, 0), **w_kwargs),   # w1: resident
            pl.BlockSpec((1, h_p), lambda i: (0, 0), **w_kwargs),         # b1
            pl.BlockSpec((h_p, out_size), lambda i: (0, 0), **w_kwargs),  # w2: resident
            pl.BlockSpec((1, out_size), lambda i: (0, 0), **w_kwargs),    # b2
        ],
        out_specs=pl.BlockSpec((tm, out_size), lambda i: (i, 0)),
        compiler_params=pltpu.CompilerParams(
            dimension_semantics=("parallel",),      # megacore / 2-TC sharding
            vmem_limit_bytes=vmem_limit),
    )(x_in, w1_p, b1_p, w2_p, b2_p)

    return out_p if batch_p == batch else out_p[:batch]


def init_params(key, in_size, hidden_size, out_size):
    """PyTorch-style Linear init: U(-1/sqrt(fan_in), 1/sqrt(fan_in)).
    Weights stored transposed: [in_features, out_features]."""
    ks = jax.random.split(key, 4)

    def uniform(k, shape, fan_in):
        bound = 1.0 / jnp.sqrt(jnp.asarray(fan_in, jnp.float32))
        return jax.random.uniform(k, shape, jnp.float32, -bound, bound)

    w1 = uniform(ks[0], (in_size, hidden_size), in_size)
    b1 = uniform(ks[1], (hidden_size,), in_size)
    w2 = uniform(ks[2], (hidden_size, out_size), hidden_size)
    b2 = uniform(ks[3], (out_size,), hidden_size)
    return (w1, b1, w2, b2)


def reference_forward(state, params):
    """Pure-JAX f32 reference with the PyTorch module's semantics."""
    w1, b1, w2, b2 = params
    h = jnp.maximum(state @ w1 + b1, 0.0)
    logits = h @ w2 + b2
    return jax.nn.softmax(logits, axis=1)


if __name__ == "__main__":
    # small shapes consistent with the module's forward: state is [batch, in_size]
    batch, in_size, hidden_size, out_size = 8, 16, 32, 8

    key = jax.random.PRNGKey(0)
    k_x, k_p = jax.random.split(key)
    state = jax.random.normal(k_x, (batch, in_size), jnp.float32)
    params = init_params(k_p, in_size, hidden_size, out_size)

    # one-time weight preparation (hoisted out of the per-call path)
    prepared = jax.block_until_ready(prepare_params(params))

    out = actor_forward(state, prepared)
    out = jax.block_until_ready(out)

    ref = reference_forward(state, params)
    assert out.shape == (batch, out_size)
    # bf16 matmul operands -> compare to the f32 reference with a loose tolerance
    assert jnp.allclose(out, ref, atol=2e-2, rtol=2e-2), "mismatch vs f32 reference"
    # exact divide in the kernel -> rows sum to 1 to f32 precision
    assert jnp.allclose(jnp.sum(out, axis=1), 1.0, atol=1e-3), "softmax rows must sum to 1"

    print("KERNEL_OK")
</pallas_src>

<mosaic_0001>
module attributes {stable_mosaic.version = 11 : i64} {
  func.func @_actor_kernel(%arg0: i32, %arg1: memref<8x16xf32, #tpu.memory_space<vmem>>, %arg2: memref<16x128xbf16, #tpu.memory_space<vmem>>, %arg3: memref<1x128xf32, #tpu.memory_space<vmem>>, %arg4: memref<128x8xbf16, #tpu.memory_space<vmem>>, %arg5: memref<1x8xf32, #tpu.memory_space<vmem>>, %arg6: memref<8x8xf32, #tpu.memory_space<vmem>>) attributes {dimension_semantics = [#tpu.dimension_semantics<parallel>], iteration_bounds = array<i64: 1>, scalar_prefetch = 0 : i64, scratch_operands = 0 : i64, tpu.core_type = #tpu.core_type<tc>, window_params = [{transform_indices = @transform_0, window_bounds = array<i64: 8, 16>}, {pipeline_mode = #tpu.pipeline_mode<synchronous>, transform_indices = @transform_1, window_bounds = array<i64: 16, 128>}, {pipeline_mode = #tpu.pipeline_mode<synchronous>, transform_indices = @transform_2, window_bounds = array<i64: 1, 128>}, {pipeline_mode = #tpu.pipeline_mode<synchronous>, transform_indices = @transform_3, window_bounds = array<i64: 128, 8>}, {pipeline_mode = #tpu.pipeline_mode<synchronous>, transform_indices = @transform_4, window_bounds = array<i64: 1, 8>}, {transform_indices = @transform_5, window_bounds = array<i64: 8, 8>}]} {
    %c0 = arith.constant 0 : index
    %c0_0 = arith.constant 0 : index
    %0 = vector.load %arg1[%c0, %c0_0] : memref<8x16xf32, #tpu.memory_space<vmem>>, vector<8x16xf32>
    %1 = arith.truncf %0 : vector<8x16xf32> to vector<8x16xbf16>
    %c0_1 = arith.constant 0 : index
    %c0_2 = arith.constant 0 : index
    %2 = vector.load %arg2[%c0_1, %c0_2] : memref<16x128xbf16, #tpu.memory_space<vmem>>, vector<16x128xbf16>
    %cst = arith.constant dense<0.000000e+00> : vector<8x128xf32>
    %3 = tpu.matmul %1, %2, %cst {dimension_numbers = #tpu.dot_dimension_numbers<[1], [0], [0], [1], [0, 0, 1, 1], [], []>} : vector<8x16xbf16>, vector<16x128xbf16>, vector<8x128xf32> -> vector<8x128xf32>
    %c0_3 = arith.constant 0 : index
    %c0_4 = arith.constant 0 : index
    %4 = vector.load %arg3[%c0_3, %c0_4] : memref<1x128xf32, #tpu.memory_space<vmem>>, vector<1x128xf32>
    %5 = vector.broadcast %4 : vector<1x128xf32> to vector<8x128xf32>
    %6 = arith.addf %3, %5 : vector<8x128xf32>
    %cst_5 = arith.constant 0.000000e+00 : f32
    %7 = vector.broadcast %cst_5 : f32 to vector<8x128xf32>
    %8 = arith.maximumf %6, %7 : vector<8x128xf32>
    %9 = arith.truncf %8 : vector<8x128xf32> to vector<8x128xbf16>
    %c0_6 = arith.constant 0 : index
    %c0_7 = arith.constant 0 : index
    %10 = vector.load %arg4[%c0_6, %c0_7] : memref<128x8xbf16, #tpu.memory_space<vmem>>, vector<128x8xbf16>
    %cst_8 = arith.constant dense<0.000000e+00> : vector<8x8xf32>
    %11 = tpu.matmul %9, %10, %cst_8 {dimension_numbers = #tpu.dot_dimension_numbers<[1], [0], [0], [1], [0, 0, 1, 1], [], []>} : vector<8x128xbf16>, vector<128x8xbf16>, vector<8x8xf32> -> vector<8x8xf32>
    %c0_9 = arith.constant 0 : index
    %c0_10 = arith.constant 0 : index
    %12 = vector.load %arg5[%c0_9, %c0_10] : memref<1x8xf32, #tpu.memory_space<vmem>>, vector<1x8xf32>
    %13 = vector.broadcast %12 : vector<1x8xf32> to vector<8x8xf32>
    %14 = arith.addf %11, %13 : vector<8x8xf32>
    %cst_11 = arith.constant dense<0xFF800000> : vector<8xf32>
    %15 = vector.multi_reduction <maximumf>, %14, %cst_11 [1] : vector<8x8xf32> to vector<8xf32>
    %16 = vector.shape_cast %15 : vector<8xf32> to vector<8x1xf32>
    %17 = vector.broadcast %16 : vector<8x1xf32> to vector<8x8xf32>
    %18 = arith.subf %14, %17 : vector<8x8xf32>
    %19 = math.exp %18 : vector<8x8xf32>
    %cst_12 = arith.constant dense<0.000000e+00> : vector<8xf32>
    %20 = vector.multi_reduction <add>, %19, %cst_12 [1] : vector<8x8xf32> to vector<8xf32>
    %21 = vector.shape_cast %20 : vector<8xf32> to vector<8x1xf32>
    %22 = vector.broadcast %21 : vector<8x1xf32> to vector<8x8xf32>
    %23 = arith.divf %19, %22 : vector<8x8xf32>
    %c0_13 = arith.constant 0 : index
    %c0_14 = arith.constant 0 : index
    %24 = vector.load %arg6[%c0_13, %c0_14] : memref<8x8xf32, #tpu.memory_space<vmem>>, vector<8x8xf32>
    tpu.vector_store %arg6[%c0_13, %c0_14], %23 {strides = array<i32>} : memref<8x8xf32, #tpu.memory_space<vmem>>, vector<8x8xf32>,
    return
  }
  func.func @transform_0(%arg0: i32) -> (i32, i32) {
    %c0_i32 = arith.constant 0 : i32
    %c0_i32_0 = arith.constant 0 : i32
    return %arg0, %c0_i32 : i32, i32
  }
  func.func @transform_1(%arg0: i32) -> (i32, i32) {
    %c0_i32 = arith.constant 0 : i32
    %c0_i32_0 = arith.constant 0 : i32
    %c0_i32_1 = arith.constant 0 : i32
    return %c0_i32, %c0_i32_0 : i32, i32
  }
  func.func @transform_2(%arg0: i32) -> (i32, i32) {
    %c0_i32 = arith.constant 0 : i32
    %c0_i32_0 = arith.constant 0 : i32
    %c0_i32_1 = arith.constant 0 : i32
    return %c0_i32, %c0_i32_0 : i32, i32
  }
  func.func @transform_3(%arg0: i32) -> (i32, i32) {
    %c0_i32 = arith.constant 0 : i32
    %c0_i32_0 = arith.constant 0 : i32
    %c0_i32_1 = arith.constant 0 : i32
    return %c0_i32, %c0_i32_0 : i32, i32
  }
  func.func @transform_4(%arg0: i32) -> (i32, i32) {
    %c0_i32 = arith.constant 0 : i32
    %c0_i32_0 = arith.constant 0 : i32
    %c0_i32_1 = arith.constant 0 : i32
    return %c0_i32, %c0_i32_0 : i32, i32
  }
  func.func @transform_5(%arg0: i32) -> (i32, i32) {
    %c0_i32 = arith.constant 0 : i32
    %c0_i32_0 = arith.constant 0 : i32
    return %arg0, %c0_i32 : i32, i32
  }
}

</mosaic_0001>

<llo_original>
// kernel: tpu_custom_call.1
$region0: #{tpu_custom_call.1}
  #allocation0 [shape = 'u32[]', space=smem, size = 0x4, offset = 0x4, fixed_abs, tag = 'smem constant byte address 0x4 - core index']
  #allocation1 [shape = 'u32[144,128]{1,0:T(1,128)}', space=vmem, size = 0x12000, scoped, tag = 'internal scratch']
  %s0 = inlined_call_operand.vmem [shape: f32[8,16], index: 0, kind: input, shape index: {}]
  %s1 = inlined_call_operand.vmem [shape: bf16[16,128], index: 1, kind: input, shape index: {}]
  %s2 = inlined_call_operand.vmem [shape: f32[1,128], index: 2, kind: input, shape index: {}]
  %s3 = inlined_call_operand.vmem [shape: bf16[128,8], index: 3, kind: input, shape index: {}]
  %s4 = inlined_call_operand.vmem [shape: f32[1,8], index: 4, kind: input, shape index: {}]
  %s5 = inlined_call_operand.hbm [shape: f32[8,8], index: 5, kind: output, shape index: {}]
  %s6 = sld [smem:[#allocation0]]
  $region30: #{tpu_custom_call.1} parent=0
    _
  %s8 = ssub.s32 1, %s6
  %s9 = scalar_select 0, %s8, %s6
  $region1: #{tpu_custom_call.1} parent=0
    #allocation2 [shape = 'u8[4096]{0}', space=vmem, size = 0x1000, scoped, tag = 'output window, operand 0, single buffered']
    #allocation3 [shape = 's32[1]{0}', space=sflag, size = 0x4, scoped, tag = 'scoped memory for tpu_custom_call.1']
    %10 = vsyncpa [#allocation3], 0
    // Predicated region
    $region2: #{tpu_custom_call.1} parent=1 // pred_check
      _
    $region3: #{tpu_custom_call.1} parent=1 // pred_check_branch
      %12 = sbr.rel (0) target = $region5
    $region4: #{tpu_custom_call.1} parent=1 // pred_region
      _
    $region5: #{tpu_custom_call.1} parent=1 // pred_fallthru
      _
    // Predicated region
    $region6: #{tpu_custom_call.1} parent=1 // pred_check
      _
    $region7: #{tpu_custom_call.1} parent=1 // pred_check_branch
      %14 = sbr.rel (0) target = $region9
    $region8: #{tpu_custom_call.1} parent=1 // pred_region
      _
    $region9: #{tpu_custom_call.1} parent=1 // pred_fallthru
      _
    // Predicated region
    $region10: #{tpu_custom_call.1} parent=1 // pred_check
      _
    $region11: #{tpu_custom_call.1} parent=1 // pred_check_branch
      %16 = sbr.rel (0) target = $region13
    $region12: #{tpu_custom_call.1} parent=1 // pred_region
      _
    $region13: #{tpu_custom_call.1} parent=1 // pred_fallthru
      _
    // Predicated region
    $region14: #{tpu_custom_call.1} parent=1 // pred_check
      _
    $region15: #{tpu_custom_call.1} parent=1 // pred_check_branch
      %18 = sbr.rel (0) target = $region17
    $region16: #{tpu_custom_call.1} parent=1 // pred_region
      _
    $region17: #{tpu_custom_call.1} parent=1 // pred_fallthru
      _
    // Predicated region
    $region18: #{tpu_custom_call.1} parent=1 // pred_check
      _
    $region19: #{tpu_custom_call.1} parent=1 // pred_check_branch
      %20 = sbr.rel (0) target = $region21
    $region20: #{tpu_custom_call.1} parent=1 // pred_region
      _
    $region21: #{tpu_custom_call.1} parent=1 // pred_fallthru
      _
    %v22 = vld [vmem:[%s0] sm:$0xff]
    %v23 = vpack.c.bf16 %v22, %v22
    %v24 = vld [vmem:[%s1] sm:$0xf]
    %v25 = vld [vmem:[%s1 + $0x4] sm:$0xf]
    %v26 = vld [vmem:[%s2] sm:$0x1]
    %v28 = vlaneseq
    %v29 = vshrl.u32 %v28, 7
    %v30 = vsub.s32 0, %v29
    %v31 = vrot.slane %v26, %v30
    %v35 = vunpack.c.l.b16 %v24
    %v36 = vunpack.c.l.b16 %v25
    %v37 = vpack.c.b16 %v36, %v35
    %vm39 = vcmask 130048
    %v41 = vsel %vm39, %v23, 0
    %43 = vmatprep.subr.bf16.mxu0 0
    %44 = vmatpush1.bf16.msra.mxu0 0
    %45 = vmatprep.subr.bf16.mxu0 0
    %46 = vmatpush1.bf16.msra.mxu0 0
    %47 = vmatprep.subr.bf16.mxu0 0
    %48 = vmatpush1.bf16.msra.mxu0 0
    %49 = vmatprep.subr.bf16.mxu0 0
    %50 = vmatpush1.bf16.msra.mxu0 0
    %51 = vmatprep.subr.bf16.mxu0 0
    %52 = vmatpush1.bf16.msra.mxu0 0
    %53 = vmatprep.subr.bf16.mxu0 0
    %54 = vmatpush1.bf16.msra.mxu0 0
    %55 = vmatprep.subr.bf16.mxu0 0
    %56 = vmatpush1.bf16.msra.mxu0 0
    %57 = vmatprep.subr.bf16.mxu0 0
    %58 = vmatpush1.bf16.msra.mxu0 %v37
    %59 = vmatprep.subr.bf16.mxu0 0
    %60 = vmatpush2.bf16.msra.mxu0 0
    %61 = vmatprep.subr.bf16.mxu0 0
    %62 = vmatpush2.bf16.msra.mxu0 0
    %63 = vmatprep.subr.bf16.mxu0 0
    %64 = vmatpush2.bf16.msra.mxu0 0
    %65 = vmatprep.subr.bf16.mxu0 0
    %66 = vmatpush2.bf16.msra.mxu0 0
    %67 = vmatprep.subr.bf16.mxu0 0
    %68 = vmatpush2.bf16.msra.mxu0 0
    %69 = vmatprep.subr.bf16.mxu0 0
    %70 = vmatpush2.bf16.msra.mxu0 0
    %71 = vmatprep.subr.bf16.mxu0 0
    %72 = vmatpush2.bf16.msra.mxu0 0
    %73 = vmatprep.subr.bf16.mxu0 0
    %74 = vmatpush2.bf16.msra.mxu0 0
    %75 = vmatprep.mubr.bf16.mxu0 0
    %76 = vmatmul.mubr.bf16.gmra.mxu0 %v41
    %v77 = vpop.f32.mrf.mxu0
    %v78 = vadd.f32 %v31, %v77
    %v79 = vpop.f32.mrf.mxu0
    %v80 = vpop.f32.mrf.mxu0
    %v81 = vpop.f32.mrf.mxu0
    %82 = vdwg.mxu0
    %v83 = vmax.f32 %v78, 0.0
    %v84 = vpack.c.bf16 %v83, %v83
    %v85 = vld [vmem:[%s3] sm:$0xf]
    %v86 = vld [vmem:[%s3 + $0x4] sm:$0xf]
    %v87 = vld [vmem:[%s3 + $0x8] sm:$0xf]
    %v88 = vld [vmem:[%s3 + $0xc] sm:$0xf]
    %v89 = vld [vmem:[%s3 + $0x10] sm:$0xf]
    %v90 = vld [vmem:[%s3 + $0x14] sm:$0xf]
    %v91 = vld [vmem:[%s3 + $0x18] sm:$0xf]
    %v92 = vld [vmem:[%s3 + $0x1c] sm:$0xf]
    %v93 = vld [vmem:[%s3 + $0x20] sm:$0xf]
    %v94 = vld [vmem:[%s3 + $0x24] sm:$0xf]
    %v95 = vld [vmem:[%s3 + $0x28] sm:$0xf]
    %v96 = vld [vmem:[%s3 + $0x2c] sm:$0xf]
    %v97 = vld [vmem:[%s3 + $0x30] sm:$0xf]
    %v98 = vld [vmem:[%s3 + $0x34] sm:$0xf]
    %v99 = vld [vmem:[%s3 + $0x38] sm:$0xf]
    %v100 = vld [vmem:[%s3 + $0x3c] sm:$0xf]
    %v101 = vld [vmem:[%s4] sm:$0x1]
    %v103 = vlaneseq
    %v104 = vshrl.u32 %v103, 7
    %v105 = vsub.s32 0, %v104
    %v106 = vrot.slane %v101, %v105
    %v124 = vunpack.c.l.b16 %v85
    %v125 = vunpack.c.l.b16 %v86
    %v126 = vunpack.c.l.b16 %v87
    %v127 = vunpack.c.l.b16 %v88
    %v128 = vunpack.c.l.b16 %v89
    %v129 = vunpack.c.l.b16 %v90
    %v130 = vunpack.c.l.b16 %v91
    %v131 = vunpack.c.l.b16 %v92
    %v132 = vunpack.c.l.b16 %v93
    %v133 = vunpack.c.l.b16 %v94
    %v134 = vunpack.c.l.b16 %v95
    %v135 = vunpack.c.l.b16 %v96
    %v136 = vunpack.c.l.b16 %v97
    %v137 = vunpack.c.l.b16 %v98
    %v138 = vunpack.c.l.b16 %v99
    %v139 = vunpack.c.l.b16 %v100
    %v140 = vpack.c.b16 %v125, %v124
    %v141 = vpack.c.b16 %v127, %v126
    %v142 = vpack.c.b16 %v129, %v128
    %v143 = vpack.c.b16 %v131, %v130
    %v144 = vpack.c.b16 %v133, %v132
    %v145 = vpack.c.b16 %v135, %v134
    %v146 = vpack.c.b16 %v137, %v136
    %v147 = vpack.c.b16 %v139, %v138
    %156 = vmatprep.subr.bf16.mxu0 0
    %157 = vmatpush1.bf16.msra.mxu0 %v147
    %158 = vmatprep.subr.bf16.mxu0 0
    %159 = vmatpush1.bf16.msra.mxu0 %v146
    %160 = vmatprep.subr.bf16.mxu0 0
    %161 = vmatpush1.bf16.msra.mxu0 %v145
    %162 = vmatprep.subr.bf16.mxu0 0
    %163 = vmatpush1.bf16.msra.mxu0 %v144
    %164 = vmatprep.subr.bf16.mxu0 0
    %165 = vmatpush1.bf16.msra.mxu0 %v143
    %166 = vmatprep.subr.bf16.mxu0 0
    %167 = vmatpush1.bf16.msra.mxu0 %v142
    %168 = vmatprep.subr.bf16.mxu0 0
    %169 = vmatpush1.bf16.msra.mxu0 %v141
    %170 = vmatprep.subr.bf16.mxu0 0
    %171 = vmatpush1.bf16.msra.mxu0 %v140
    %172 = vmatprep.subr.bf16.mxu0 0
    %173 = vmatpush2.bf16.msra.mxu0 0
    %174 = vmatprep.subr.bf16.mxu0 0
    %175 = vmatpush2.bf16.msra.mxu0 0
    %176 = vmatprep.subr.bf16.mxu0 0
    %177 = vmatpush2.bf16.msra.mxu0 0
    %178 = vmatprep.subr.bf16.mxu0 0
    %179 = vmatpush2.bf16.msra.mxu0 0
    %180 = vmatprep.subr.bf16.mxu0 0
    %181 = vmatpush2.bf16.msra.mxu0 0
    %182 = vmatprep.subr.bf16.mxu0 0
    %183 = vmatpush2.bf16.msra.mxu0 0
    %184 = vmatprep.subr.bf16.mxu0 0
    %185 = vmatpush2.bf16.msra.mxu0 0
    %186 = vmatprep.subr.bf16.mxu0 0
    %187 = vmatpush2.bf16.msra.mxu0 0
    %188 = vmatprep.mubr.bf16.mxu0 0
    %189 = vmatmul.mubr.bf16.gmra.mxu0 %v84
    %v190 = vpop.f32.mrf.mxu0
    %v191 = vadd.f32 %v106, %v190
    %v192 = vpop.f32.mrf.mxu0
    %v193 = vpop.f32.mrf.mxu0
    %v194 = vpop.f32.mrf.mxu0
    %195 = vdwg.mxu0
    %vm196 = vcmask 64512
    %v197 = vsel %vm196, %v191, -inf
    %198 = vmax.xlane.f32.xlu0 %v197
    %v199 = vpop.xlane.xlu0 %198
    %v200 = vsub.f32 %v191, %v199
    %v201 = vmul.f32 %v200, 1.442695
    %v202 = vpow.pop %v201
    %v203 = vsel %vm196, %v202, 0.0
    %204 = vadd.xlane.f32.xlu0 %v203
    %v205 = vpop.xlane.xlu0 %204
    %v206 = vrcp.pop %v205
    %v207 = vmul.f32 %v202, %v206
    %208 = vst.msk [vmem:[#allocation2] sm:$0xff] %vm196, %v207
    // Predicated region
    $region22: #{tpu_custom_call.1} parent=1 // pred_check
      _
    $region23: #{tpu_custom_call.1} parent=1 // pred_check_branch
      %210 = sbr.rel (0) target = $region25
    $region24: #{tpu_custom_call.1} parent=1 // pred_region
      %s212 = ssub.s32 128, 128
      %213 = vsyncadd [#allocation3], %s212
      %s215 = sshll.u32 [#allocation2], 4
      %s216 = int_to_ptr.vmem [resolvable:$true] %s215
      %218 = dma.vmem_to_hbm [thread:$0]  %s216, 128, %s5, [#allocation3]
    $region25: #{tpu_custom_call.1} parent=1 // pred_fallthru
      _
    // Predicated region
    $region26: #{tpu_custom_call.1} parent=1 // pred_check
      _
    $region27: #{tpu_custom_call.1} parent=1 // pred_check_branch
      %220 = sbr.rel (0) target = $region29
    $region28: #{tpu_custom_call.1} parent=1 // pred_region
      %221 = dma.done [#allocation3], 128
    $region29: #{tpu_custom_call.1} parent=1 // pred_fallthru
      _
    %222 = vsyncpa [#allocation3], 1

</llo_original>
